<compile_context>
chip_gen: v5e
topology: v5e:2x2
jax: 0.10.0
libtpu: 0.0.40
codegen_flags: <defaults>
</compile_context>

<pallas_src>
import functools

import jax
import jax.numpy as jnp
from jax import lax
from jax.experimental import pallas as pl
from jax.experimental.pallas import tpu as pltpu

_LANES = 128


def _round_up(x, m):
    return ((x + m - 1) // m) * m


def _device_kind():
    try:
        return jax.devices()[0].device_kind.lower()
    except Exception:
        return ""


def _is_v7x(kind):
    return ("v7" in kind) or ("7x" in kind)


def _default_num_chunks():
    # Only v7x has 2 TensorCores per chip; the size-2 "parallel" chunk axis is
    # pure overhead (duplicate overhang DMA + extra finalize) on v5e / v6e.
    return 2 if _is_v7x(_device_kind()) else 1


def _default_tile_cols():
    kind = _device_kind()
    if "v6" in kind:
        return 8192          # 128 MiB VMEM, 1.4 TB/s HBM: longest DMAs pay off
    if _is_v7x(kind):
        return 4096          # only 64 MiB physical VMEM per TensorCore
    return 4096              # v5e: fits comfortably under the raised limit


def _sce_kernel(pred_ref, labels_ref, out_ref, acc_ref, *,
                a, b, n_total, tile_cols, tiles_per_chunk):
    chunk = pl.program_id(0)      # "parallel" axis (megacore split on v7x)
    j = pl.program_id(1)          # reduction axis over column tiles

    @pl.when(j == 0)
    def _init():
        acc_ref[...] = jnp.zeros_like(acc_ref)

    pred = pred_ref[...].astype(jnp.float32)        # (C, TILE) f32
    labels = labels_ref[...]                        # (1, TILE) int32
    c, tile = pred.shape

    # Column (batch) validity from the LOGICAL tile index (pre-clamp), so the
    # ragged last tile and clamped overhang slots contribute exactly zero.
    tile_idx = chunk * tiles_per_chunk + j
    col_ids = tile_idx * tile_cols + lax.broadcasted_iota(jnp.int32, (1, tile), 1)
    valid = col_ids < n_total                       # (1, TILE) bool

    # Class id per sublane; label match without materializing a one-hot.
    cls_ids = lax.broadcasted_iota(jnp.int32, (c, tile), 0)
    is_label = cls_ids == labels                    # (1,TILE) bcast over sublanes

    # Numerically stable softmax pieces (class axis = sublanes).
    m = jnp.max(pred, axis=0, keepdims=True)        # (1, TILE)
    exps = jnp.exp(pred - m)                        # (C, TILE)  EUP, lane-dense
    sum_exp = jnp.sum(exps, axis=0, keepdims=True)  # (1, TILE)
    recip = pl.reciprocal(sum_exp, approx=True)     # (1, TILE)  EUP vrcp

    # Logit at the label (select + sublane reduce).
    pred_at_label = jnp.sum(jnp.where(is_label, pred, 0.0), axis=0, keepdims=True)

    # Cross entropy per column: logsumexp - logit_at_label.
    ce = (m + jnp.log(sum_exp)) - pred_at_label     # (1, TILE)

    # Reverse cross entropy per column:
    #   -sum_c clip(p_c,1e-4,1) * log(clip(onehot_c,1e-4,1))
    #   = -log(1e-4) * (sum_c clip(p_c,1e-4,1) - clip(p_label,1e-4,1))
    # (upper clip kept because of the approx reciprocal).
    p_clip = jnp.clip(exps * recip, 1e-4, 1.0)                    # (C, TILE)
    sum_p_clip = jnp.sum(p_clip, axis=0, keepdims=True)           # (1, TILE)
    p_at_label = jnp.clip(jnp.exp(pred_at_label - m) * recip, 1e-4, 1.0)
    neg_log_eps = -jnp.log(jnp.float32(1e-4))                     # trace-time const
    rce = neg_log_eps * (sum_p_clip - p_at_label)                 # (1, TILE)

    per_col = jnp.where(valid, a * ce + b * rce, 0.0)             # (1, TILE)
    acc_ref[...] += per_col                                       # VMEM vector acc

    @pl.when(j == pl.num_programs(1) - 1)
    def _finalize():
        partial = jnp.sum(acc_ref[...]) * (1.0 / n_total)
        # Lane-dense write: broadcast the chunk partial across a 128-lane slab.
        out_ref[...] = jnp.full((1, _LANES), partial, dtype=jnp.float32)


def sce_loss(pred, labels, *, num_classes=36, a=1.0, b=0.1,
             tile_cols=None, num_chunks=None, class_major=False):
    """Symmetric Cross Entropy loss.

    pred:   (N, C) logits (or (C, N) if class_major=True), labels: (N,) ints.
    Returns a scalar f32 loss.
    """
    if class_major:
        pred_cn = pred                      # already (C, N): no relayout pass
        c, n = pred.shape
    else:
        n, c = pred.shape
        pred_cn = jnp.transpose(pred)       # (N, C) -> (C, N): one XLA pass
    assert c == num_classes
    labels2d = labels.reshape(1, n).astype(jnp.int32)   # lane-dense labels

    if tile_cols is None:
        tile_cols = _default_tile_cols()
    if num_chunks is None:
        num_chunks = _default_num_chunks()

    # Column tile: multiple of 128 (lanes), capped at the 128-padded N.
    n_pad = _round_up(n, _LANES)
    tile_cols = max(_LANES, min(_round_up(tile_cols, _LANES), n_pad))

    total_tiles = pl.cdiv(n, tile_cols)
    num_chunks = max(1, min(num_chunks, total_tiles))
    tiles_per_chunk = pl.cdiv(total_tiles, num_chunks)
    if num_chunks > 1:
        # Balance the two TensorCores: shrink the tile so the chunk grid covers
        # N with minimal slack (clamped overhang slots rarely fire).
        tile_cols = max(_LANES,
                        _round_up(pl.cdiv(n, num_chunks * tiles_per_chunk), _LANES))
        total_tiles = pl.cdiv(n, tile_cols)

    # Clamp block index for overhang (chunk, j) slots; any clamped slot's
    # logical column range is entirely >= N, so it is fully masked in-kernel.
    def tile_map(chunk, j):
        t = jnp.minimum(chunk * tiles_per_chunk + j, total_tiles - 1)
        return (0, t)

    kernel = functools.partial(
        _sce_kernel, a=float(a), b=float(b), n_total=n,
        tile_cols=tile_cols, tiles_per_chunk=tiles_per_chunk)

    partials = pl.pallas_call(
        kernel,
        out_shape=jax.ShapeDtypeStruct((1, num_chunks * _LANES), jnp.float32),
        grid=(num_chunks, tiles_per_chunk),
        in_specs=[
            pl.BlockSpec((c, tile_cols), tile_map),   # logits, native dtype
            pl.BlockSpec((1, tile_cols), tile_map),   # labels, lane-dense
        ],
        out_specs=pl.BlockSpec((1, _LANES), lambda chunk, j: (0, chunk)),
        scratch_shapes=[pltpu.VMEM((1, tile_cols), jnp.float32)],
        compiler_params=pltpu.CompilerParams(
            dimension_semantics=("parallel", "arbitrary"),
            vmem_limit_bytes=32 * 1024 * 1024),
    )(pred_cn, labels2d)

    # Each chunk wrote (its_partial_sum / N) broadcast over 128 lanes; sum lane
    # 0 of each chunk's slab.
    return jnp.sum(partials.reshape(num_chunks, _LANES)[:, 0])


def _reference(pred, labels, *, num_classes=36, a=1.0, b=0.1):
    # Pure-JAX reference mirroring the PyTorch module.
    logits = pred.astype(jnp.float32)
    logp = jax.nn.log_softmax(logits, axis=1)
    one_hot = jax.nn.one_hot(labels, num_classes, dtype=jnp.float32)
    ce = -jnp.mean(jnp.sum(one_hot * logp, axis=1))
    p = jnp.clip(jax.nn.softmax(logits, axis=1), 1e-4, 1.0)
    oh = jnp.clip(one_hot, 1e-4, 1.0)
    rce = -jnp.sum(p * jnp.log(oh), axis=1)
    return a * ce + b * jnp.mean(rce)


if __name__ == "__main__":
    num_classes = 36
    a, b = 1.0, 0.1

    key = jax.random.PRNGKey(0)
    k_pred, k_lab = jax.random.split(key)

    # Multi-tile, ragged batch: 300 columns with 128-wide tiles -> 3 tiles
    # (last ragged); num_chunks=2 also exercises the clamped-overhang masking
    # and the per-chunk accumulate/finalize path (works on single-TC chips too).
    batch = 300
    pred = jax.random.normal(k_pred, (batch, num_classes), dtype=jnp.float32)
    labels = jax.random.randint(k_lab, (batch,), 0, num_classes, dtype=jnp.int32)
    ref = _reference(pred, labels, num_classes=num_classes, a=a, b=b)

    loss = sce_loss(pred, labels, num_classes=num_classes, a=a, b=b,
                    tile_cols=128, num_chunks=2)
    loss = jax.block_until_ready(loss)
    assert jnp.allclose(loss, ref, rtol=2e-3, atol=2e-3), (loss, ref)

    # Per-generation defaults (auto num_chunks / tile_cols): single tile
    # covering the whole (padded) batch.
    loss1 = sce_loss(pred, labels, num_classes=num_classes, a=a, b=b)
    loss1 = jax.block_until_ready(loss1)
    assert jnp.allclose(loss1, ref, rtol=2e-3, atol=2e-3), (loss1, ref)

    # Small-batch smoke test (single ragged 128-wide tile).
    batch2 = 50
    pred2 = jax.random.normal(k_pred, (batch2, num_classes), dtype=jnp.float32)
    labels2 = jax.random.randint(k_lab, (batch2,), 0, num_classes, dtype=jnp.int32)
    ref2 = _reference(pred2, labels2, num_classes=num_classes, a=a, b=b)
    loss2 = jax.block_until_ready(
        sce_loss(pred2, labels2, num_classes=num_classes, a=a, b=b))
    assert jnp.allclose(loss2, ref2, rtol=2e-3, atol=2e-3), (loss2, ref2)

    print("KERNEL_OK")
</pallas_src>

<mosaic_0001>
module attributes {stable_mosaic.version = 11 : i64} {
  func.func @_sce_kernel(%arg0: i32, %arg1: i32, %arg2: memref<36x128xf32, #tpu.memory_space<vmem>>, %arg3: memref<1x128xi32, #tpu.memory_space<vmem>>, %arg4: memref<1x128xf32, #tpu.memory_space<vmem>>, %arg5: memref<1x128xf32, #tpu.memory_space<vmem>>) attributes {dimension_semantics = [#tpu.dimension_semantics<parallel>, #tpu.dimension_semantics<arbitrary>], iteration_bounds = array<i64: 2, 2>, scalar_prefetch = 0 : i64, scratch_operands = 1 : i64, tpu.core_type = #tpu.core_type<tc>, window_params = [{transform_indices = @transform_0, window_bounds = array<i64: 36, 128>}, {transform_indices = @transform_1, window_bounds = array<i64: 1, 128>}, {transform_indices = @transform_2, window_bounds = array<i64: 1, 128>}]} {
    %c0_i32 = arith.constant 0 : i32
    %0 = arith.cmpi eq, %arg1, %c0_i32 : i32
    %1 = arith.extui %0 : i1 to i32
    %c0_i32_0 = arith.constant 0 : i32
    %2 = arith.cmpi ne, %1, %c0_i32_0 : i32
    scf.if %2 {
      %cst_22 = arith.constant 0.000000e+00 : f32
      %64 = vector.broadcast %cst_22 : f32 to vector<1x128xf32>
      %c0_23 = arith.constant 0 : index
      %c0_24 = arith.constant 0 : index
      %65 = vector.load %arg5[%c0_23, %c0_24] : memref<1x128xf32, #tpu.memory_space<vmem>>, vector<1x128xf32>
      tpu.vector_store %arg5[%c0_23, %c0_24], %64 {strides = array<i32>} : memref<1x128xf32, #tpu.memory_space<vmem>>, vector<1x128xf32>,
    } else {
    }
    %c0 = arith.constant 0 : index
    %c0_1 = arith.constant 0 : index
    %3 = vector.load %arg2[%c0, %c0_1] : memref<36x128xf32, #tpu.memory_space<vmem>>, vector<36x128xf32>
    %c0_2 = arith.constant 0 : index
    %c0_3 = arith.constant 0 : index
    %4 = vector.load %arg3[%c0_2, %c0_3] : memref<1x128xi32, #tpu.memory_space<vmem>>, vector<1x128xi32>
    %c2_i32 = arith.constant 2 : i32
    %5 = arith.muli %arg0, %c2_i32 : i32
    %6 = arith.addi %5, %arg1 : i32
    %c128_i32 = arith.constant 128 : i32
    %7 = arith.muli %6, %c128_i32 : i32
    %8 = tpu.iota {dimensions = array<i32: 1>} : vector<1x128xi32>
    %9 = vector.broadcast %7 : i32 to vector<1x128xi32>
    %10 = arith.addi %9, %8 : vector<1x128xi32>
    %c300_i32 = arith.constant 300 : i32
    %11 = vector.broadcast %c300_i32 : i32 to vector<1x128xi32>
    %12 = arith.cmpi slt, %10, %11 : vector<1x128xi32>
    %13 = tpu.iota {dimensions = array<i32: 0>} : vector<36x128xi32>
    %14 = vector.broadcast %4 : vector<1x128xi32> to vector<36x128xi32>
    %15 = arith.cmpi eq, %13, %14 : vector<36x128xi32>
    %cst = arith.constant dense<0xFF800000> : vector<128xf32>
    %16 = vector.multi_reduction <maximumf>, %3, %cst [0] : vector<36x128xf32> to vector<128xf32>
    %17 = vector.shape_cast %16 : vector<128xf32> to vector<1x128xf32>
    %18 = vector.broadcast %17 : vector<1x128xf32> to vector<36x128xf32>
    %19 = arith.subf %3, %18 : vector<36x128xf32>
    %20 = math.exp %19 : vector<36x128xf32>
    %cst_4 = arith.constant dense<0.000000e+00> : vector<128xf32>
    %21 = vector.multi_reduction <add>, %20, %cst_4 [0] : vector<36x128xf32> to vector<128xf32>
    %22 = vector.shape_cast %21 : vector<128xf32> to vector<1x128xf32>
    %23 = tpu.reciprocal %22 {approx = true} : vector<1x128xf32> -> vector<1x128xf32>
    %cst_5 = arith.constant 0.000000e+00 : f32
    %24 = vector.broadcast %cst_5 : f32 to vector<36x128xf32>
    %25 = arith.select %15, %3, %24 : vector<36x128xi1>, vector<36x128xf32>
    %cst_6 = arith.constant dense<0.000000e+00> : vector<128xf32>
    %26 = vector.multi_reduction <add>, %25, %cst_6 [0] : vector<36x128xf32> to vector<128xf32>
    %27 = vector.shape_cast %26 : vector<128xf32> to vector<1x128xf32>
    %28 = math.log %22 : vector<1x128xf32>
    %29 = arith.addf %17, %28 : vector<1x128xf32>
    %30 = arith.subf %29, %27 : vector<1x128xf32>
    %31 = vector.broadcast %23 : vector<1x128xf32> to vector<36x128xf32>
    %32 = arith.mulf %20, %31 : vector<36x128xf32>
    %cst_7 = arith.constant 9.99999974E-5 : f32
    %cst_8 = arith.constant 1.000000e+00 : f32
    %33 = vector.broadcast %cst_7 : f32 to vector<36x128xf32>
    %34 = arith.maximumf %33, %32 : vector<36x128xf32>
    %35 = vector.broadcast %cst_8 : f32 to vector<36x128xf32>
    %36 = arith.minimumf %35, %34 : vector<36x128xf32>
    %cst_9 = arith.constant dense<0.000000e+00> : vector<128xf32>
    %37 = vector.multi_reduction <add>, %36, %cst_9 [0] : vector<36x128xf32> to vector<128xf32>
    %38 = vector.shape_cast %37 : vector<128xf32> to vector<1x128xf32>
    %39 = arith.subf %27, %17 : vector<1x128xf32>
    %40 = math.exp %39 : vector<1x128xf32>
    %41 = arith.mulf %40, %23 : vector<1x128xf32>
    %cst_10 = arith.constant 9.99999974E-5 : f32
    %cst_11 = arith.constant 1.000000e+00 : f32
    %42 = vector.broadcast %cst_10 : f32 to vector<1x128xf32>
    %43 = arith.maximumf %42, %41 : vector<1x128xf32>
    %44 = vector.broadcast %cst_11 : f32 to vector<1x128xf32>
    %45 = arith.minimumf %44, %43 : vector<1x128xf32>
    %cst_12 = arith.constant 9.99999974E-5 : f32
    %46 = math.log %cst_12 : f32
    %cst_13 = arith.constant 0.000000e+00 : f32
    %47 = arith.subf %cst_13, %46 : f32
    %48 = arith.subf %38, %45 : vector<1x128xf32>
    %49 = vector.broadcast %47 : f32 to vector<1x128xf32>
    %50 = arith.mulf %49, %48 : vector<1x128xf32>
    %cst_14 = arith.constant 1.000000e+00 : f32
    %51 = vector.broadcast %cst_14 : f32 to vector<1x128xf32>
    %52 = arith.mulf %51, %30 : vector<1x128xf32>
    %cst_15 = arith.constant 1.000000e-01 : f32
    %53 = vector.broadcast %cst_15 : f32 to vector<1x128xf32>
    %54 = arith.mulf %53, %50 : vector<1x128xf32>
    %55 = arith.addf %52, %54 : vector<1x128xf32>
    %cst_16 = arith.constant 0.000000e+00 : f32
    %56 = vector.broadcast %cst_16 : f32 to vector<1x128xf32>
    %57 = arith.select %12, %55, %56 : vector<1x128xi1>, vector<1x128xf32>
    %c0_17 = arith.constant 0 : index
    %c0_18 = arith.constant 0 : index
    %58 = vector.load %arg5[%c0_17, %c0_18] : memref<1x128xf32, #tpu.memory_space<vmem>>, vector<1x128xf32>
    %59 = arith.addf %58, %57 : vector<1x128xf32>
    %c0_19 = arith.constant 0 : index
    %c0_20 = arith.constant 0 : index
    %60 = vector.load %arg5[%c0_19, %c0_20] : memref<1x128xf32, #tpu.memory_space<vmem>>, vector<1x128xf32>
    tpu.vector_store %arg5[%c0_19, %c0_20], %59 {strides = array<i32>} : memref<1x128xf32, #tpu.memory_space<vmem>>, vector<1x128xf32>,
    %c1_i32 = arith.constant 1 : i32
    %61 = arith.cmpi eq, %arg1, %c1_i32 : i32
    %62 = arith.extui %61 : i1 to i32
    %c0_i32_21 = arith.constant 0 : i32
    %63 = arith.cmpi ne, %62, %c0_i32_21 : i32
    scf.if %63 {
      %c0_22 = arith.constant 0 : index
      %c0_23 = arith.constant 0 : index
      %64 = vector.load %arg5[%c0_22, %c0_23] : memref<1x128xf32, #tpu.memory_space<vmem>>, vector<1x128xf32>
      %65 = vector.shape_cast %64 : vector<1x128xf32> to vector<1x1x128xf32>
      %cst_24 = arith.constant dense<0.000000e+00> : vector<1xf32>
      %66 = vector.multi_reduction <add>, %65, %cst_24 [1, 2] : vector<1x1x128xf32> to vector<1xf32>
      %67 = vector.shape_cast %66 : vector<1xf32> to vector<1x1x1xf32>
      %68 = vector.extract %67[0, 0, 0] : f32 from vector<1x1x1xf32>
      %cst_25 = arith.constant 0.00333333341 : f32
      %69 = arith.mulf %68, %cst_25 : f32
      %70 = vector.broadcast %69 : f32 to vector<1x128xf32>
      %c0_26 = arith.constant 0 : index
      %c0_27 = arith.constant 0 : index
      %71 = vector.load %arg4[%c0_26, %c0_27] : memref<1x128xf32, #tpu.memory_space<vmem>>, vector<1x128xf32>
      tpu.vector_store %arg4[%c0_26, %c0_27], %70 {strides = array<i32>} : memref<1x128xf32, #tpu.memory_space<vmem>>, vector<1x128xf32>,
    } else {
    }
    return
  }
  func.func @transform_0(%arg0: i32, %arg1: i32) -> (i32, i32) {
    %c2_i32 = arith.constant 2 : i32
    %0 = arith.muli %arg0, %c2_i32 : i32
    %1 = arith.addi %0, %arg1 : i32
    %c2_i32_0 = arith.constant 2 : i32
    %2 = arith.minsi %1, %c2_i32_0 : i32
    %c0_i32 = arith.constant 0 : i32
    %c0_i32_1 = arith.constant 0 : i32
    return %c0_i32, %2 : i32, i32
  }
  func.func @transform_1(%arg0: i32, %arg1: i32) -> (i32, i32) {
    %c2_i32 = arith.constant 2 : i32
    %0 = arith.muli %arg0, %c2_i32 : i32
    %1 = arith.addi %0, %arg1 : i32
    %c2_i32_0 = arith.constant 2 : i32
    %2 = arith.minsi %1, %c2_i32_0 : i32
    %c0_i32 = arith.constant 0 : i32
    %c0_i32_1 = arith.constant 0 : i32
    return %c0_i32, %2 : i32, i32
  }
  func.func @transform_2(%arg0: i32, %arg1: i32) -> (i32, i32) {
    %c0_i32 = arith.constant 0 : i32
    %c0_i32_0 = arith.constant 0 : i32
    return %c0_i32, %arg0 : i32, i32
  }
}

</mosaic_0001>

<llo_original>
// kernel: tpu_custom_call.1
$region0: #{tpu_custom_call.1}
  #allocation0 [shape = 'u32[]', space=smem, size = 0x4, offset = 0x4, fixed_abs, tag = 'smem constant byte address 0x4 - core index']
  #allocation1 [shape = 'u32[72,128]{1,0:T(1,128)}', space=vmem, size = 0x9000, scoped, tag = 'internal scratch']
  #allocation2 [shape = 'f32[1,128]{1,0:T(1,128)}', space=vmem, size = 0x200, scoped, tag = 'scratch operand']
  %s0 = inlined_call_operand.hbm [shape: f32[36,300], index: 0, kind: input, shape index: {}]
  %s1 = inlined_call_operand.hbm [shape: s32[1,300], index: 1, kind: input, shape index: {}]
  %s2 = inlined_call_operand.hbm [shape: f32[1,256], index: 2, kind: output, shape index: {}]
  %s3 = sld [smem:[#allocation0]]
  $region57: #{tpu_custom_call.1} parent=0
    _
  %s5 = ssub.s32 1, %s3
  %s6 = scalar_select 0, %s5, %s3
  $region1: #{tpu_custom_call.1} parent=0
    #allocation3 [shape = 'u8[40960]{0}', space=vmem, size = 0xa000, scoped, tag = 'input window, operand 0']
    #allocation4 [shape = 's32[2]{0}', space=sflag, size = 0x8, scoped, tag = 'scoped memory for tpu_custom_call.1']
    #allocation5 [shape = 's32[2]{0}', space=sflag, size = 0x8, scoped, tag = 'scoped memory for tpu_custom_call.1']
    #allocation6 [shape = 'u8[1024]{0}', space=vmem, size = 0x400, scoped, tag = 'input window, operand 1']
    #allocation7 [shape = 's32[2]{0}', space=sflag, size = 0x8, scoped, tag = 'scoped memory for tpu_custom_call.1']
    #allocation8 [shape = 'u8[1024]{0}', space=vmem, size = 0x400, scoped, tag = 'output window, operand 0']
    %7 = vsyncpa [#allocation4], 0
    %s8 = scalar_lea.sflag [#allocation4], 1
    %9 = vsyncpa %s8, 0
    %10 = vsyncpa [#allocation7], 0
    %s11 = scalar_lea.sflag [#allocation7], 1
    %12 = vsyncpa %s11, 0
    %13 = vsyncpa [#allocation5], 0
    %s14 = scalar_lea.sflag [#allocation5], 1
    %15 = vsyncpa %s14, 0
    loop: start=0, step=1, limit=6
    $region2: #{tpu_custom_call.1} parent=1 // loop_pre_header
      _
    $region3: #{tpu_custom_call.1} parent=1 // loop_header
      %s17 = sphi 0, %s21
      %p18 = scmp.ge.s32.totalorder %s17, 6
      %s24 = sphi 0, %s36
      %s25 = sphi 0, %s32
      %s26 = sphi 0, %s24
      %s27 = sphi 0, %s25
      %s28 = sphi 0, %s26
      %s29 = sphi 0, %s27
      %s47 = sphi 0, %s49
      %s50 = sphi 0, %s47
      %s51 = sphi 0, %s50
      %s67 = sphi 0, %s51
      %s81 = sphi 0, %s83
      %s84 = sphi 0, %s81
      %s85 = sphi 0, %s84
      %s101 = sphi 0, %s85
      %s107 = sphi 0, %s109
      %s110 = sphi 0, %s107
      %s111 = sphi 0, %s110
      %s127 = sphi 0, %s111
    $region4: #{tpu_custom_call.1} parent=1 // loop_header_branch
      %20 = sbr.rel (%p18) target = $region8
    $region5: #{tpu_custom_call.1} parent=1 // loop_body
      %s22 = ssub.s32 %s17, 1
      %s23 = ssub.s32 %s17, 2
      %s30 = sadd.s32 1, %s25
      %p31 = scmp.ge.s32.totalorder %s30, 2
      %s32 = scalar_select %p31, 0, %s30
      %s33 = sadd.s32 1, %s24
      %s34 = scalar_select %p31, %s33, %s24
      %p35 = scmp.ge.s32.totalorder %s34, 2
      %s36 = scalar_select %p35, 0, %s34
      %s37 = smul.u32 %s24, 2
      %s38 = sadd.s32 %s37, %s25
      %p39 = scmp.lt.s32.totalorder %s38, 2
      %s40 = scalar_select %p39, %s38, 2
      %s41 = smul.u32 %s36, 2
      %s42 = sadd.s32 %s41, %s32
      %p43 = scmp.lt.s32.totalorder %s42, 2
      %s44 = scalar_select %p43, %s42, 2
      %s45 = ssub.s32 %s40, %s44
      %p46 = scmp.eq.s32.totalorder %s45, 0
      %s48 = sadd.s32 %s47, 1
      %s49 = scalar_select %p46, %s47, %s48
      %p52 = pneg %p46
      %p53 = scmp.eq.s32.totalorder %s17, 3
      %p54 = por %p52, %p53
      %p55 = scmp.ne.s32.totalorder %s47, %s50
      %p56 = scmp.eq.s32.totalorder %s17, 0
      %p57 = por %p55, %p56
      %p58 = scmp.ne.s32.totalorder %s47, %s50
      %p59 = scmp.eq.s32.totalorder %s22, 3
      %p60 = por %p58, %p59
      %p61 = scmp.ne.s32.totalorder %s50, %s51
      %p62 = scmp.eq.s32.totalorder %s22, 0
      %p63 = por %p61, %p62
      %p64 = scmp.ne.s32.totalorder %s50, %s51
      %p65 = scmp.eq.s32.totalorder %s23, 3
      %p66 = por %p64, %p65
      %p68 = scmp.ne.s32.totalorder %s51, %s67
      %p69 = scmp.eq.s32.totalorder %s23, 0
      %p70 = por %p68, %p69
      %s71 = smul.u32 %s24, 2
      %s72 = sadd.s32 %s71, %s25
      %p73 = scmp.lt.s32.totalorder %s72, 2
      %s74 = scalar_select %p73, %s72, 2
      %s75 = smul.u32 %s36, 2
      %s76 = sadd.s32 %s75, %s32
      %p77 = scmp.lt.s32.totalorder %s76, 2
      %s78 = scalar_select %p77, %s76, 2
      %s79 = ssub.s32 %s74, %s78
      %p80 = scmp.eq.s32.totalorder %s79, 0
      %s82 = sadd.s32 %s81, 1
      %s83 = scalar_select %p80, %s81, %s82
      %p86 = pneg %p80
      %p87 = scmp.eq.s32.totalorder %s17, 3
      %p88 = por %p86, %p87
      %p89 = scmp.ne.s32.totalorder %s81, %s84
      %p90 = scmp.eq.s32.totalorder %s17, 0
      %p91 = por %p89, %p90
      %p92 = scmp.ne.s32.totalorder %s81, %s84
      %p93 = scmp.eq.s32.totalorder %s22, 3
      %p94 = por %p92, %p93
      %p95 = scmp.ne.s32.totalorder %s84, %s85
      %p96 = scmp.eq.s32.totalorder %s22, 0
      %p97 = por %p95, %p96
      %p98 = scmp.ne.s32.totalorder %s84, %s85
      %p99 = scmp.eq.s32.totalorder %s23, 3
      %p100 = por %p98, %p99
      %p102 = scmp.ne.s32.totalorder %s85, %s101
      %p103 = scmp.eq.s32.totalorder %s23, 0
      %p104 = por %p102, %p103
      %s105 = ssub.s32 %s24, %s36
      %p106 = scmp.eq.s32.totalorder %s105, 0
      %s108 = sadd.s32 %s107, 1
      %s109 = scalar_select %p106, %s107, %s108
      %p112 = pneg %p106
      %p113 = scmp.eq.s32.totalorder %s17, 3
      %p114 = por %p112, %p113
      %p115 = scmp.ne.s32.totalorder %s107, %s110
      %p116 = scmp.eq.s32.totalorder %s17, 0
      %p117 = por %p115, %p116
      %p118 = scmp.ne.s32.totalorder %s107, %s110
      %p119 = scmp.eq.s32.totalorder %s22, 3
      %p120 = por %p118, %p119
      %p121 = scmp.ne.s32.totalorder %s110, %s111
      %p122 = scmp.eq.s32.totalorder %s22, 0
      %p123 = por %p121, %p122
      %p124 = scmp.ne.s32.totalorder %s110, %s111
      %p125 = scmp.eq.s32.totalorder %s23, 3
      %p126 = por %p124, %p125
      %p128 = scmp.ne.s32.totalorder %s111, %s127
      %p129 = scmp.eq.s32.totalorder %s23, 0
      %p130 = por %p128, %p129
      %p131 = scmp.le.s32.totalorder 1, %s17
      %p132 = scmp.lt.s32.totalorder %s17, 5
      %p133 = pnand %p131, %p132
      %p134 = pneg %p133
      // Predicated region
      $region9: #{tpu_custom_call.1} parent=5 // pred_check
        _
      $region10: #{tpu_custom_call.1} parent=5 // pred_check_branch
        %136 = sbr.rel (%p133) target = $region12
      $region11: #{tpu_custom_call.1} parent=5 // pred_region
        %s137 = ssub.s32 %s17, 1
      $region12: #{tpu_custom_call.1} parent=5 // pred_fallthru
        _
      %p138 = scmp.lt.s32.totalorder %s17, 4
      // Predicated region
      $region13: #{tpu_custom_call.1} parent=5 // pred_check
        %p139 = pneg %p138
      $region14: #{tpu_custom_call.1} parent=5 // pred_check_branch
        %141 = sbr.rel (%p139) target = $region16
      $region15: #{tpu_custom_call.1} parent=5 // pred_region
        // Predicated region
        $region17: #{tpu_custom_call.1} parent=15 // pred_check
          %p142 = pneg %p57
        $region18: #{tpu_custom_call.1} parent=15 // pred_check_branch
          %144 = sbr.rel (%p142) target = $region20
        $region19: #{tpu_custom_call.1} parent=15 // pred_region
          %s145 = sand.u32 %s47, 1
          %s146 = scalar_lea.sflag [#allocation4], %s145
          %s147 = sand.u32 %s47, 1
          %s148 = smul.addr %s147, 40
          %s149 = scalar_lea.vmem [#allocation3], %s148
          %s150 = smul.u32 %s24, 2
          %s151 = sadd.s32 %s150, %s25
          %p152 = scmp.lt.s32.totalorder %s151, 2
          %s153 = scalar_select %p152, %s151, 2
          %155 = vsyncadd %s146, 0
          %s156 = smul.addr %s153, 8
          %s157 = scalar_lea.hbm %s0, %s156
          %s158 = sshll.u32 %s157, 4
          %s159 = int_to_ptr.hbm [resolvable:$true] %s158
          %s160 = sshll.u32 %s149, 4
          %s161 = int_to_ptr.vmem [resolvable:$true] %s160
          %166 = dma.hbm_to_vmem [thread:$0]  %s159, 640, %s161, %s146, 384, 128, 8
        $region20: #{tpu_custom_call.1} parent=15 // pred_fallthru
          _
        // Predicated region
        $region21: #{tpu_custom_call.1} parent=15 // pred_check
          %p167 = pneg %p91
        $region22: #{tpu_custom_call.1} parent=15 // pred_check_branch
          %169 = sbr.rel (%p167) target = $region24
        $region23: #{tpu_custom_call.1} parent=15 // pred_region
          %s170 = sand.u32 %s81, 1
          %s171 = scalar_lea.sflag [#allocation7], %s170
          %s172 = sand.u32 %s81, 1
          %s173 = scalar_lea.vmem [#allocation6], %s172
          %s174 = smul.u32 %s24, 2
          %s175 = sadd.s32 %s174, %s25
          %p176 = scmp.lt.s32.totalorder %s175, 2
          %s177 = scalar_select %p176, %s175, 2
          %179 = vsyncadd %s171, 0
          %s180 = scalar_lea.hbm %s1, %s177
          %s182 = sshll.u32 %s180, 4
          %s183 = int_to_ptr.hbm [resolvable:$true] %s182
          %s184 = sshll.u32 %s173, 4
          %s185 = int_to_ptr.vmem [resolvable:$true] %s184
          %187 = dma.hbm_to_vmem [thread:$0]  %s183, 16, %s185, %s171
        $region24: #{tpu_custom_call.1} parent=15 // pred_fallthru
          _
      $region16: #{tpu_custom_call.1} parent=5 // pred_fallthru
        _
      %p188 = scmp.le.s32.totalorder 1, %s17
      %p189 = scmp.lt.s32.totalorder %s17, 5
      %p190 = pnand %p188, %p189
      %p191 = pneg %p190
      // Predicated region
      $region25: #{tpu_custom_call.1} parent=5 // pred_check
        _
      $region26: #{tpu_custom_call.1} parent=5 // pred_check_branch
        %193 = sbr.rel (%p190) target = $region28
      $region27: #{tpu_custom_call.1} parent=5 // pred_region
        %s194 = ssub.s32 %s17, 1
        %s195 = sand.u32 %s50, 1
        %s196 = scalar_lea.sflag [#allocation4], %s195
        %s197 = sand.u32 %s50, 1
        %s198 = smul.addr %s197, 40
        %s199 = scalar_lea.vmem [#allocation3], %s198
        // Predicated region
        $region29: #{tpu_custom_call.1} parent=27 // pred_check
          %p200 = pneg %p63
        $region30: #{tpu_custom_call.1} parent=27 // pred_check_branch
          %202 = sbr.rel (%p200) target = $region32
        $region31: #{tpu_custom_call.1} parent=27 // pred_region
          %204 = dma.done %s196, 640
        $region32: #{tpu_custom_call.1} parent=27 // pred_fallthru
          _
        %s205 = sand.u32 %s84, 1
        %s206 = scalar_lea.sflag [#allocation7], %s205
        %s207 = sand.u32 %s84, 1
        %s208 = scalar_lea.vmem [#allocation6], %s207
        // Predicated region
        $region33: #{tpu_custom_call.1} parent=27 // pred_check
          %p209 = pneg %p97
        $region34: #{tpu_custom_call.1} parent=27 // pred_check_branch
          %211 = sbr.rel (%p209) target = $region36
        $region35: #{tpu_custom_call.1} parent=27 // pred_region
          %213 = dma.done %s206, 16
        $region36: #{tpu_custom_call.1} parent=27 // pred_fallthru
          _
        %s214 = sand.u32 %s50, 1
        %s215 = scalar_lea.sflag [#allocation4], %s214
        %s216 = sand.u32 %s50, 1
        %s217 = smul.addr %s216, 40
        %s218 = scalar_lea.vmem [#allocation3], %s217
        %p219 = pneg %p63
        %p220 = pneg %p60
        %s221 = sand.u32 %s84, 1
        %s222 = scalar_lea.sflag [#allocation7], %s221
        %s223 = sand.u32 %s84, 1
        %s224 = scalar_lea.vmem [#allocation6], %s223
        %p225 = pneg %p97
        %p226 = pneg %p94
        %p227 = pneg %p123
        %p228 = pneg %p120
        %s229 = sand.u32 %s110, 1
        %s230 = scalar_lea.sflag [#allocation5], %s229
        %s231 = sand.u32 %s110, 1
        %s232 = scalar_lea.vmem [#allocation8], %s231
        %s233 = smul.u32 %s26, 2
        %s234 = sadd.s32 %s233, %s27
        %p235 = scmp.lt.s32.totalorder %s234, 2
        %s236 = scalar_select %p235, %s234, 2
        %s237 = smul.u32 %s26, 2
        %s238 = sadd.s32 %s237, %s27
        %p239 = scmp.lt.s32.totalorder %s238, 2
        %s240 = scalar_select %p239, %s238, 2
        %p241 = scmp.eq.s32.totalorder %s27, 0
        // Predicated region
        $region37: #{tpu_custom_call.1} parent=27 // pred_check
          %p242 = pneg %p241
        $region38: #{tpu_custom_call.1} parent=27 // pred_check_branch
          %244 = sbr.rel (%p242) target = $region40
        $region39: #{tpu_custom_call.1} parent=27 // pred_region
          %245 = vst [vmem:[#allocation2] sm:$0x1] 0.0
        $region40: #{tpu_custom_call.1} parent=27 // pred_fallthru
          _
        %v246 = vld [vmem:[%s199] sm:$0xff]
        %v247 = vld [vmem:[%s199 + $0x8] sm:$0xff]
        %v248 = vld [vmem:[%s199 + $0x10] sm:$0xff]
        %v249 = vld [vmem:[%s199 + $0x18] sm:$0xff]
        %v250 = vld [vmem:[%s199 + $0x20] sm:$0xf]
        %v251 = vld [vmem:[%s208] sm:$0x1]
        %s252 = smul.u32 %s26, 2
        %s253 = sadd.s32 %s252, %s27
        %s254 = smul.u32 %s253, 128
        %v255 = vlaneseq
        %v256 = vand.u32 %v255, 127
        %v257 = vstv %s254
        %v258 = vadd.s32 %v257, %v256
        %vm259 = vcmp.lt.s32.totalorder %v258, 300
        %v260 = vlaneseq
        %v261 = vshrl.u32 %v260, 7
        %v262 = vadd.s32 %v261, 8
        %v263 = vadd.s32 %v261, 16
        %v264 = vadd.s32 %v261, 24
        %v265 = vadd.s32 %v261, 32
        %v266 = vperm.slane %v251, 0
        %vm267 = vcmp.eq.s32.totalorder %v261, %v266
        %vm268 = vcmp.eq.s32.totalorder %v262, %v266
        %vm269 = vcmp.eq.s32.totalorder %v263, %v266
        %vm270 = vcmp.eq.s32.totalorder %v264, %v266
        %vm271 = vcmp.eq.s32.totalorder %v265, %v266
        %vm272 = vcmask 1043456
        %v273 = vsel %vm272, %v250, -inf
        %v274 = vmax.f32 %v246, %v273
        %v275 = vmax.f32 %v274, %v247
        %v276 = vmax.f32 %v248, %v249
        %v277 = vmax.f32 %v275, %v276
        %v278 = vrot.slane %v277, 4
        %v279 = vmax.f32 %v277, %v278
        %v280 = vrot.slane %v279, 2
        %v281 = vmax.f32 %v279, %v280
        %v282 = vrot.slane %v281, 1
        %v283 = vmax.f32 %v281, %v282
        %v284 = vsub.f32 %v246, %v283
        %v285 = vsub.f32 %v247, %v283
        %v286 = vsub.f32 %v248, %v283
        %v287 = vsub.f32 %v249, %v283
        %v288 = vsub.f32 %v250, %v283
        %v289 = vmul.f32 %v284, 1.442695
        %v290 = vpow.pop %v289
        %v291 = vmul.f32 %v285, 1.442695
        %v292 = vpow.pop %v291
        %v293 = vmul.f32 %v286, 1.442695
        %v294 = vpow.pop %v293
        %v295 = vmul.f32 %v287, 1.442695
        %v296 = vpow.pop %v295
        %v297 = vmul.f32 %v288, 1.442695
        %v298 = vpow.pop %v297
        %v299 = vadd.f32 %v290, %v292
        %v300 = vadd.f32 %v299, %v294
        %v301 = vadd.f32 %v300, %v296
        %v302 = vsel %vm272, %v298, 0.0
        %v303 = vadd.f32 %v301, %v302
        %v304 = vrot.slane %v303, 4
        %v305 = vadd.f32 %v303, %v304
        %v306 = vrot.slane %v305, 2
        %v307 = vadd.f32 %v305, %v306
        %v308 = vrot.slane %v307, 1
        %v309 = vadd.f32 %v307, %v308
        %v310 = vrcp.pop %v309
        %v311 = vsel %vm267, %v246, 0.0
        %v312 = vsel %vm268, %v247, 0.0
        %v313 = vsel %vm269, %v248, 0.0
        %v314 = vsel %vm270, %v249, 0.0
        %v315 = vsel %vm271, %v250, 0.0
        %v316 = vadd.f32 %v311, %v312
        %v317 = vadd.f32 %v316, %v313
        %v318 = vadd.f32 %v317, %v314
        %v319 = vsel %vm272, %v315, 0.0
        %v320 = vadd.f32 %v318, %v319
        %v321 = vrot.slane %v320, 4
        %v322 = vadd.f32 %v320, %v321
        %v323 = vrot.slane %v322, 2
        %v324 = vadd.f32 %v322, %v323
        %v325 = vrot.slane %v324, 1
        %v326 = vadd.f32 %v324, %v325
        %v327 = vlog2.pop %v309
        %v328 = vmul.f32 %v327, 0.6931472
        %v329 = vadd.f32 %v283, %v328
        %v330 = vsub.f32 %v329, %v326
        %v331 = vmul.f32 %v290, %v310
        %v332 = vmul.f32 %v292, %v310
        %v333 = vmul.f32 %v294, %v310
        %v334 = vmul.f32 %v296, %v310
        %v335 = vmul.f32 %v298, %v310
        %v336 = vmax.f32 %v331, 0.0001
        %v337 = vmax.f32 %v332, 0.0001
        %v338 = vmax.f32 %v333, 0.0001
        %v339 = vmax.f32 %v334, 0.0001
        %v340 = vmax.f32 %v335, 0.0001
        %v341 = vmin.f32 %v336, 1.0
        %v342 = vmin.f32 %v337, 1.0
        %v343 = vmin.f32 %v338, 1.0
        %v344 = vmin.f32 %v339, 1.0
        %v345 = vmin.f32 %v340, 1.0
        %v346 = vadd.f32 %v341, %v342
        %v347 = vadd.f32 %v346, %v343
        %v348 = vadd.f32 %v347, %v344
        %v349 = vsel %vm272, %v345, 0.0
        %v350 = vadd.f32 %v348, %v349
        %v351 = vrot.slane %v350, 4
        %v352 = vadd.f32 %v350, %v351
        %v353 = vrot.slane %v352, 2
        %v354 = vadd.f32 %v352, %v353
        %v355 = vrot.slane %v354, 1
        %v356 = vadd.f32 %v354, %v355
        %v357 = vsub.f32 %v326, %v283
        %v358 = vmul.f32 %v357, 1.442695
        %v359 = vpow.pop %v358
        %v360 = vmul.f32 %v359, %v310
        %v361 = vmax.f32 %v360, 0.0001
        %v362 = vmin.f32 %v361, 1.0
        %v363 = vsub.f32 %v356, %v362
        %v364 = vmul.f32 %v363, 9.2103405
        %v365 = vmul.f32 %v364, 0.1
        %v366 = vadd.f32 %v330, %v365
        %v367 = vsel %vm259, %v366, 0.0
        %v368 = vld [vmem:[#allocation2] sm:$0x1]
        %v369 = vadd.f32 %v368, %v367
        %370 = vst [vmem:[#allocation2] sm:$0x1] %v369
        %p371 = scmp.eq.s32.totalorder %s27, 1
        // Predicated region
        $region41: #{tpu_custom_call.1} parent=27 // pred_check
          %p372 = pneg %p371
        $region42: #{tpu_custom_call.1} parent=27 // pred_check_branch
          %374 = sbr.rel (%p372) target = $region44
        $region43: #{tpu_custom_call.1} parent=27 // pred_region
          %v375 = vld [vmem:[#allocation2] sm:$0x1]
          %vm376 = vcmask 1040384
          %v377 = vsel %vm376, %v375, 0.0
          %378 = vadd.xlane.f32.xlu0 %v377
          %v379 = vpop.xlane.xlu0 %378
          %v380 = vrot.slane %v379, 4
          %v381 = vadd.f32 %v379, %v380
          %v382 = vrot.slane %v381, 2
          %v383 = vadd.f32 %v381, %v382
          %v384 = vrot.slane %v383, 1
          %v385 = vadd.f32 %v383, %v384
          %s386 = vtos %v385
          %s387 = smul.f32 %s386, 0.0033333334
          %v388 = vstv %s387
          %389 = vst [vmem:[%s232] sm:$0x1] %v388
        $region44: #{tpu_custom_call.1} parent=27 // pred_fallthru
          _
        %s390 = sand.u32 %s110, 1
        %s391 = scalar_lea.sflag [#allocation5], %s390
        %s392 = sand.u32 %s110, 1
        %s393 = scalar_lea.vmem [#allocation8], %s392
        // Predicated region
        $region45: #{tpu_custom_call.1} parent=27 // pred_check
          %p394 = pneg %p120
        $region46: #{tpu_custom_call.1} parent=27 // pred_check_branch
          %396 = sbr.rel (%p394) target = $region48
        $region47: #{tpu_custom_call.1} parent=27 // pred_region
          %398 = vsyncadd %s391, 0
          %s399 = scalar_lea.hbm %s2, %s26
          %s401 = sshll.u32 %s393, 4
          %s402 = int_to_ptr.vmem [resolvable:$true] %s401
          %s403 = sshll.u32 %s399, 4
          %s404 = int_to_ptr.hbm [resolvable:$true] %s403
          %406 = dma.vmem_to_hbm [thread:$0]  %s402, 16, %s404, %s391
        $region48: #{tpu_custom_call.1} parent=27 // pred_fallthru
          _
      $region28: #{tpu_custom_call.1} parent=5 // pred_fallthru
        _
      %p407 = scmp.le.s32.totalorder 2, %s17
      // Predicated region
      $region49: #{tpu_custom_call.1} parent=5 // pred_check
        %p408 = pneg %p407
      $region50: #{tpu_custom_call.1} parent=5 // pred_check_branch
        %410 = sbr.rel (%p408) target = $region52
      $region51: #{tpu_custom_call.1} parent=5 // pred_region
        %s411 = ssub.s32 %s17, 2
        // Predicated region
        $region53: #{tpu_custom_call.1} parent=51 // pred_check
          %p412 = pneg %p126
        $region54: #{tpu_custom_call.1} parent=51 // pred_check_branch
          %414 = sbr.rel (%p412) target = $region56
        $region55: #{tpu_custom_call.1} parent=51 // pred_region
          %s415 = sand.u32 %s111, 1
          %s416 = scalar_lea.sflag [#allocation5], %s415
          %s417 = sand.u32 %s111, 1
          %s418 = scalar_lea.vmem [#allocation8], %s417
          %420 = dma.done %s416, 16
        $region56: #{tpu_custom_call.1} parent=51 // pred_fallthru
          _
      $region52: #{tpu_custom_call.1} parent=5 // pred_fallthru
        _
    $region6: #{tpu_custom_call.1} parent=1 // loop_footer
      %s21 = sadd.s32 1, %s17
    $region7: #{tpu_custom_call.1} parent=1 // loop_footer_branch
      %16 = sbr.rel target = $region3
    $region8: #{tpu_custom_call.1} parent=1 // loop_exit
      _
    %421 = vsyncpa [#allocation4], 1
    %s422 = scalar_lea.sflag [#allocation4], 1
    %423 = vsyncpa %s422, 1
    %424 = vsyncpa [#allocation7], 1
    %s425 = scalar_lea.sflag [#allocation7], 1
    %426 = vsyncpa %s425, 1
    %427 = vsyncpa [#allocation5], 1
    %s428 = scalar_lea.sflag [#allocation5], 1
    %429 = vsyncpa %s428, 1

</llo_original>
